<compile_context>
chip_gen: v5e
topology: v5e:2x2
jax: 0.10.0
libtpu: 0.0.40
codegen_flags: <defaults>
</compile_context>

<pallas_src>
import jax
import jax.numpy as jnp
from jax.experimental import pallas as pl
from jax.experimental.pallas import tpu as pltpu

HIDDEN = 8  # fixed by the PyTorch module definition


def _mlp_kernel(x_ref, w1_ref, b1_ref, w2_ref, b2_ref, w3_ref, b3_ref, o_ref):
    # x_ref: (tm, p*n_features) packed batch tile; weights are block-diagonal
    # expansions so each packed row carries `p` independent samples.
    x = x_ref[...]

    h1 = jnp.dot(x, w1_ref[...], preferred_element_type=jnp.float32)
    h1 = jnp.maximum(h1 + b1_ref[...], 0.0)                     # ReLU

    h2 = jnp.dot(h1, w2_ref[...], preferred_element_type=jnp.float32)
    h2 = jnp.maximum(h2 + b2_ref[...], 0.0)                     # ReLU

    logits = jnp.dot(h2, w3_ref[...], preferred_element_type=jnp.float32)
    logits = logits + b3_ref[...]

    # sigmoid = 1 / (1 + exp(-x)); exp and the approximate reciprocal both run
    # on the otherwise-idle EUP slot instead of a VALU divide.
    e = jnp.exp(-logits)
    o_ref[...] = pl.reciprocal(1.0 + e, approx=True).astype(o_ref.dtype)


def _block_diag(w: jax.Array, p: int) -> jax.Array:
    """(a, b) -> (p*a, p*b) with `w` repeated on the diagonal blocks."""
    if p == 1:
        return w
    a, b = w.shape
    eye = jnp.eye(p, dtype=w.dtype)
    return (eye[:, None, :, None] * w[None, :, None, :]).reshape(p * a, p * b)


def mlp_forward(x: jax.Array, params, *, tile_rows: int = 16384) -> jax.Array:
    """Fused MLP forward pass: (M, n_features) -> (M, n_classes)."""
    w1, b1, w2, b2, w3, b3 = params
    m, n_features = x.shape
    n_classes = w3.shape[1]
    dtype_bytes = 4  # f32

    # ---- pick the row-packing factor p --------------------------------------
    # Pack p samples per lane-dense row so the narrow dims (hidden=8, classes)
    # span >=128 lanes; cap p so the expanded first-layer weight stays a small
    # VMEM-resident block.
    min_dim = max(1, min(n_features, HIDDEN, n_classes))
    p = 1
    while p * min_dim < 128:
        p *= 2
    while p > 1 and p * p * n_features * HIDDEN * dtype_bytes > (4 << 20):
        p //= 2

    # ---- pack x: (M, nf) -> (M/p, p*nf) (row-major contiguous reshape) ------
    m_pad = ((m + p - 1) // p) * p
    x_p = x if m_pad == m else jnp.pad(x, ((0, m_pad - m), (0, 0)))
    packed_rows = m_pad // p
    x_p = x_p.reshape(packed_rows, p * n_features)

    # ---- block-diagonal weights / tiled biases -------------------------------
    w1_p = _block_diag(w1, p)
    w2_p = _block_diag(w2, p)
    w3_p = _block_diag(w3, p)
    b1_p = jnp.tile(b1, p).reshape(1, p * HIDDEN)
    b2_p = jnp.tile(b2, p).reshape(1, p * HIDDEN)
    b3_p = jnp.tile(b3, p).reshape(1, p * n_classes)

    in_w, hid_w, out_w = p * n_features, p * HIDDEN, p * n_classes

    # ---- batch tiling over packed rows ---------------------------------------
    target = max(1, tile_rows // p)           # desired packed rows per step
    target = max(32, (target // 32) * 32)     # sublane aligned (bf16-safe)
    if packed_rows <= target:
        tm = packed_rows                      # single block == full dim (legal)
        grid = (1,)
    else:
        tm = target
        grid = (pl.cdiv(packed_rows, tm),)

    # ---- explicit VMEM budget: double-buffered I/O + weights + live temps ----
    w_bytes = (p * p * (n_features * HIDDEN + HIDDEN * HIDDEN + HIDDEN * n_classes)
               + p * (2 * HIDDEN + n_classes)) * dtype_bytes
    io_bytes = 2 * tm * (in_w + out_w) * dtype_bytes
    tmp_bytes = 3 * tm * (2 * hid_w + out_w) * dtype_bytes
    vmem_limit = int(min(56 << 20,
                         max(16 << 20, io_bytes + 2 * w_bytes + tmp_bytes + (8 << 20))))

    cost = pl.CostEstimate(
        flops=2 * m_pad * p * (n_features * HIDDEN + HIDDEN * HIDDEN + HIDDEN * n_classes),
        transcendentals=2 * m_pad * n_classes,           # exp + reciprocal
        bytes_accessed=m_pad * (n_features + n_classes) * dtype_bytes + w_bytes,
    )

    out_p = pl.pallas_call(
        _mlp_kernel,
        out_shape=jax.ShapeDtypeStruct((packed_rows, out_w), x.dtype),
        grid_spec=pltpu.PrefetchScalarGridSpec(
            num_scalar_prefetch=0,
            grid=grid,
            in_specs=[
                pl.BlockSpec((tm, in_w), lambda i: (i, 0)),        # packed x tile
                pl.BlockSpec((in_w, hid_w), lambda i: (0, 0)),     # W1 (block-diag)
                pl.BlockSpec((1, hid_w), lambda i: (0, 0)),        # b1 (tiled)
                pl.BlockSpec((hid_w, hid_w), lambda i: (0, 0)),    # W2 (block-diag)
                pl.BlockSpec((1, hid_w), lambda i: (0, 0)),        # b2 (tiled)
                pl.BlockSpec((hid_w, out_w), lambda i: (0, 0)),    # W3 (block-diag)
                pl.BlockSpec((1, out_w), lambda i: (0, 0)),        # b3 (tiled)
            ],
            out_specs=pl.BlockSpec((tm, out_w), lambda i: (i, 0)),
        ),
        compiler_params=pltpu.CompilerParams(
            dimension_semantics=("parallel",),
            vmem_limit_bytes=vmem_limit,
        ),
        cost_estimate=cost,
    )(x_p, w1_p, b1_p, w2_p, b2_p, w3_p, b3_p)

    out = out_p.reshape(m_pad, n_classes)
    return out if m_pad == m else out[:m]


def mlp_reference(x, params):
    """Pure-JAX reference (matches the PyTorch forward)."""
    w1, b1, w2, b2, w3, b3 = params
    h1 = jnp.maximum(x @ w1 + b1, 0.0)
    h2 = jnp.maximum(h1 @ w2 + b2, 0.0)
    return jax.nn.sigmoid(h2 @ w3 + b3)


if __name__ == "__main__":
    key = jax.random.PRNGKey(0)
    n_features, n_classes, batch = 32, 4, 16
    keys = jax.random.split(key, 7)

    def linear_init(kw, kb, fan_in, fan_out):
        # PyTorch nn.Linear default: U(-1/sqrt(fan_in), 1/sqrt(fan_in)).
        bound = float(fan_in) ** -0.5
        w = jax.random.uniform(kw, (fan_in, fan_out), jnp.float32, -bound, bound)
        b = jax.random.uniform(kb, (fan_out,), jnp.float32, -bound, bound)
        return w, b

    w1, b1 = linear_init(keys[0], keys[1], n_features, HIDDEN)
    w2, b2 = linear_init(keys[2], keys[3], HIDDEN, HIDDEN)
    w3, b3 = linear_init(keys[4], keys[5], HIDDEN, n_classes)
    params = (w1, b1, w2, b2, w3, b3)

    x = jax.random.normal(keys[6], (batch, n_features), dtype=jnp.float32)

    y = jax.block_until_ready(mlp_forward(x, params))
    y_ref = mlp_reference(x, params)
    assert y.shape == (batch, n_classes) and y.dtype == x.dtype
    # Tolerance covers the approximate EUP reciprocal in the fused sigmoid;
    # any packing/block-diag bug would produce errors orders of magnitude larger.
    assert jnp.allclose(y, y_ref, rtol=5e-3, atol=5e-3), float(jnp.max(jnp.abs(y - y_ref)))

    # Ragged batch (not a multiple of the packing factor): exercises pad + slice.
    x2 = jax.random.normal(jax.random.PRNGKey(1), (300, n_features), dtype=jnp.float32)
    y2 = jax.block_until_ready(mlp_forward(x2, params))
    assert y2.shape == (300, n_classes)
    assert jnp.allclose(y2, mlp_reference(x2, params), rtol=5e-3, atol=5e-3)

    print("KERNEL_OK")
</pallas_src>

<mosaic_0001>
module attributes {stable_mosaic.version = 11 : i64} {
  func.func @_mlp_kernel(%arg0: i32, %arg1: memref<1x1024xf32, #tpu.memory_space<vmem>>, %arg2: memref<1024x256xf32, #tpu.memory_space<vmem>>, %arg3: memref<1x256xf32, #tpu.memory_space<vmem>>, %arg4: memref<256x256xf32, #tpu.memory_space<vmem>>, %arg5: memref<1x256xf32, #tpu.memory_space<vmem>>, %arg6: memref<256x128xf32, #tpu.memory_space<vmem>>, %arg7: memref<1x128xf32, #tpu.memory_space<vmem>>, %arg8: memref<1x128xf32, #tpu.memory_space<vmem>>) attributes {dimension_semantics = [#tpu.dimension_semantics<parallel>], iteration_bounds = array<i64: 1>, scalar_prefetch = 0 : i64, scratch_operands = 0 : i64, tpu.core_type = #tpu.core_type<tc>, window_params = [{transform_indices = @transform_0, window_bounds = array<i64: 1, 1024>}, {pipeline_mode = #tpu.pipeline_mode<synchronous>, transform_indices = @transform_1, window_bounds = array<i64: 1024, 256>}, {pipeline_mode = #tpu.pipeline_mode<synchronous>, transform_indices = @transform_2, window_bounds = array<i64: 1, 256>}, {pipeline_mode = #tpu.pipeline_mode<synchronous>, transform_indices = @transform_3, window_bounds = array<i64: 256, 256>}, {pipeline_mode = #tpu.pipeline_mode<synchronous>, transform_indices = @transform_4, window_bounds = array<i64: 1, 256>}, {pipeline_mode = #tpu.pipeline_mode<synchronous>, transform_indices = @transform_5, window_bounds = array<i64: 256, 128>}, {pipeline_mode = #tpu.pipeline_mode<synchronous>, transform_indices = @transform_6, window_bounds = array<i64: 1, 128>}, {transform_indices = @transform_7, window_bounds = array<i64: 1, 128>}]} {
    %c0 = arith.constant 0 : index
    %c0_0 = arith.constant 0 : index
    %0 = vector.load %arg1[%c0, %c0_0] : memref<1x1024xf32, #tpu.memory_space<vmem>>, vector<1x1024xf32>
    %c0_1 = arith.constant 0 : index
    %c0_2 = arith.constant 0 : index
    %1 = vector.load %arg2[%c0_1, %c0_2] : memref<1024x256xf32, #tpu.memory_space<vmem>>, vector<1024x256xf32>
    %cst = arith.constant dense<0.000000e+00> : vector<1x256xf32>
    %2 = tpu.matmul %0, %1, %cst {dimension_numbers = #tpu.dot_dimension_numbers<[1], [0], [0], [1], [0, 0, 1, 1], [], []>} : vector<1x1024xf32>, vector<1024x256xf32>, vector<1x256xf32> -> vector<1x256xf32>
    %c0_3 = arith.constant 0 : index
    %c0_4 = arith.constant 0 : index
    %3 = vector.load %arg3[%c0_3, %c0_4] : memref<1x256xf32, #tpu.memory_space<vmem>>, vector<1x256xf32>
    %4 = arith.addf %2, %3 : vector<1x256xf32>
    %cst_5 = arith.constant 0.000000e+00 : f32
    %5 = vector.broadcast %cst_5 : f32 to vector<1x256xf32>
    %6 = arith.maximumf %4, %5 : vector<1x256xf32>
    %c0_6 = arith.constant 0 : index
    %c0_7 = arith.constant 0 : index
    %7 = vector.load %arg4[%c0_6, %c0_7] : memref<256x256xf32, #tpu.memory_space<vmem>>, vector<256x256xf32>
    %cst_8 = arith.constant dense<0.000000e+00> : vector<1x256xf32>
    %8 = tpu.matmul %6, %7, %cst_8 {dimension_numbers = #tpu.dot_dimension_numbers<[1], [0], [0], [1], [0, 0, 1, 1], [], []>} : vector<1x256xf32>, vector<256x256xf32>, vector<1x256xf32> -> vector<1x256xf32>
    %c0_9 = arith.constant 0 : index
    %c0_10 = arith.constant 0 : index
    %9 = vector.load %arg5[%c0_9, %c0_10] : memref<1x256xf32, #tpu.memory_space<vmem>>, vector<1x256xf32>
    %10 = arith.addf %8, %9 : vector<1x256xf32>
    %cst_11 = arith.constant 0.000000e+00 : f32
    %11 = vector.broadcast %cst_11 : f32 to vector<1x256xf32>
    %12 = arith.maximumf %10, %11 : vector<1x256xf32>
    %c0_12 = arith.constant 0 : index
    %c0_13 = arith.constant 0 : index
    %13 = vector.load %arg6[%c0_12, %c0_13] : memref<256x128xf32, #tpu.memory_space<vmem>>, vector<256x128xf32>
    %cst_14 = arith.constant dense<0.000000e+00> : vector<1x128xf32>
    %14 = tpu.matmul %12, %13, %cst_14 {dimension_numbers = #tpu.dot_dimension_numbers<[1], [0], [0], [1], [0, 0, 1, 1], [], []>} : vector<1x256xf32>, vector<256x128xf32>, vector<1x128xf32> -> vector<1x128xf32>
    %c0_15 = arith.constant 0 : index
    %c0_16 = arith.constant 0 : index
    %15 = vector.load %arg7[%c0_15, %c0_16] : memref<1x128xf32, #tpu.memory_space<vmem>>, vector<1x128xf32>
    %16 = arith.addf %14, %15 : vector<1x128xf32>
    %cst_17 = arith.constant 0.000000e+00 : f32
    %17 = vector.broadcast %cst_17 : f32 to vector<1x128xf32>
    %18 = arith.subf %17, %16 : vector<1x128xf32>
    %19 = math.exp %18 : vector<1x128xf32>
    %cst_18 = arith.constant 1.000000e+00 : f32
    %20 = vector.broadcast %cst_18 : f32 to vector<1x128xf32>
    %21 = arith.addf %20, %19 : vector<1x128xf32>
    %22 = tpu.reciprocal %21 {approx = true} : vector<1x128xf32> -> vector<1x128xf32>
    %c0_19 = arith.constant 0 : index
    %c0_20 = arith.constant 0 : index
    %23 = vector.load %arg8[%c0_19, %c0_20] : memref<1x128xf32, #tpu.memory_space<vmem>>, vector<1x128xf32>
    tpu.vector_store %arg8[%c0_19, %c0_20], %22 {strides = array<i32>} : memref<1x128xf32, #tpu.memory_space<vmem>>, vector<1x128xf32>,
    return
  }
  func.func @transform_0(%arg0: i32) -> (i32, i32) {
    %c0_i32 = arith.constant 0 : i32
    %c0_i32_0 = arith.constant 0 : i32
    return %arg0, %c0_i32 : i32, i32
  }
  func.func @transform_1(%arg0: i32) -> (i32, i32) {
    %c0_i32 = arith.constant 0 : i32
    %c0_i32_0 = arith.constant 0 : i32
    %c0_i32_1 = arith.constant 0 : i32
    return %c0_i32, %c0_i32_0 : i32, i32
  }
  func.func @transform_2(%arg0: i32) -> (i32, i32) {
    %c0_i32 = arith.constant 0 : i32
    %c0_i32_0 = arith.constant 0 : i32
    %c0_i32_1 = arith.constant 0 : i32
    return %c0_i32, %c0_i32_0 : i32, i32
  }
  func.func @transform_3(%arg0: i32) -> (i32, i32) {
    %c0_i32 = arith.constant 0 : i32
    %c0_i32_0 = arith.constant 0 : i32
    %c0_i32_1 = arith.constant 0 : i32
    return %c0_i32, %c0_i32_0 : i32, i32
  }
  func.func @transform_4(%arg0: i32) -> (i32, i32) {
    %c0_i32 = arith.constant 0 : i32
    %c0_i32_0 = arith.constant 0 : i32
    %c0_i32_1 = arith.constant 0 : i32
    return %c0_i32, %c0_i32_0 : i32, i32
  }
  func.func @transform_5(%arg0: i32) -> (i32, i32) {
    %c0_i32 = arith.constant 0 : i32
    %c0_i32_0 = arith.constant 0 : i32
    %c0_i32_1 = arith.constant 0 : i32
    return %c0_i32, %c0_i32_0 : i32, i32
  }
  func.func @transform_6(%arg0: i32) -> (i32, i32) {
    %c0_i32 = arith.constant 0 : i32
    %c0_i32_0 = arith.constant 0 : i32
    %c0_i32_1 = arith.constant 0 : i32
    return %c0_i32, %c0_i32_0 : i32, i32
  }
  func.func @transform_7(%arg0: i32) -> (i32, i32) {
    %c0_i32 = arith.constant 0 : i32
    %c0_i32_0 = arith.constant 0 : i32
    return %arg0, %c0_i32 : i32, i32
  }
}

</mosaic_0001>

<llo_original>
// kernel: tpu_custom_call.1
$region0: #{tpu_custom_call.1}
  #allocation0 [shape = 'u32[]', space=smem, size = 0x4, offset = 0x4, fixed_abs, tag = 'smem constant byte address 0x4 - core index']
  #allocation1 [shape = 'u32[72,128]{1,0:T(1,128)}', space=vmem, size = 0x9000, scoped, tag = 'internal scratch']
  %s0 = inlined_call_operand.hbm [shape: f32[1,1024], index: 0, kind: input, shape index: {}]
  %s1 = inlined_call_operand.hbm [shape: f32[1024,256], index: 1, kind: input, shape index: {}]
  %s2 = inlined_call_operand.hbm [shape: f32[1,256], index: 2, kind: input, shape index: {}]
  %s3 = inlined_call_operand.hbm [shape: f32[256,256], index: 3, kind: input, shape index: {}]
  %s4 = inlined_call_operand.vmem [shape: f32[1,256], index: 4, kind: input, shape index: {}]
  %s5 = inlined_call_operand.hbm [shape: f32[256,128], index: 5, kind: input, shape index: {}]
  %s6 = inlined_call_operand.vmem [shape: f32[1,128], index: 6, kind: input, shape index: {}]
  %s7 = inlined_call_operand.hbm [shape: f32[1,128], index: 7, kind: output, shape index: {}]
  %s8 = sld [smem:[#allocation0]]
  $region58: #{tpu_custom_call.1} parent=0
    _
  %s10 = ssub.s32 1, %s8
  %s11 = scalar_select 0, %s10, %s8
  $region1: #{tpu_custom_call.1} parent=0
    #allocation2 [shape = 'u8[4096]{0}', space=vmem, size = 0x1000, scoped, tag = 'input window, operand 0, single buffered']
    #allocation3 [shape = 's32[1]{0}', space=sflag, size = 0x4, scoped, tag = 'scoped memory for tpu_custom_call.1']
    #allocation4 [shape = 's32[1]{0}', space=sflag, size = 0x4, scoped, tag = 'scoped memory for tpu_custom_call.1']
    #allocation5 [shape = 'u8[1048576]{0}', space=vmem, size = 0x100000, scoped, tag = 'input window, operand 1, single buffered']
    #allocation6 [shape = 's32[1]{0}', space=sflag, size = 0x4, scoped, tag = 'scoped memory for tpu_custom_call.1']
    #allocation7 [shape = 'u8[1024]{0}', space=vmem, size = 0x400, scoped, tag = 'input window, operand 2, single buffered']
    #allocation8 [shape = 'u8[262144]{0}', space=vmem, size = 0x40000, scoped, tag = 'input window, operand 3, single buffered']
    #allocation9 [shape = 's32[1]{0}', space=sflag, size = 0x4, scoped, tag = 'scoped memory for tpu_custom_call.1']
    #allocation10 [shape = 'u8[131072]{0}', space=vmem, size = 0x20000, scoped, tag = 'input window, operand 5, single buffered']
    #allocation11 [shape = 'u8[512]{0}', space=vmem, size = 0x400, scoped, tag = 'output window, operand 0, single buffered']
    %12 = vsyncpa [#allocation3], 0
    %13 = vsyncpa [#allocation6], 0
    %14 = vsyncpa [#allocation9], 0
    %15 = vsyncpa [#allocation4], 0
    // Predicated region
    $region2: #{tpu_custom_call.1} parent=1 // pred_check
      _
    $region3: #{tpu_custom_call.1} parent=1 // pred_check_branch
      %17 = sbr.rel (0) target = $region5
    $region4: #{tpu_custom_call.1} parent=1 // pred_region
      %19 = vsyncadd [#allocation3], 0
      %s21 = sshll.u32 %s0, 4
      %s22 = int_to_ptr.hbm [resolvable:$true] %s21
      %s23 = sshll.u32 [#allocation2], 4
      %s24 = int_to_ptr.vmem [resolvable:$true] %s23
      %26 = dma.hbm_to_vmem [thread:$0]  %s22, 128, %s24, [#allocation3]
    $region5: #{tpu_custom_call.1} parent=1 // pred_fallthru
      _
    // Predicated region
    $region6: #{tpu_custom_call.1} parent=1 // pred_check
      _
    $region7: #{tpu_custom_call.1} parent=1 // pred_check_branch
      %28 = sbr.rel (0) target = $region9
    $region8: #{tpu_custom_call.1} parent=1 // pred_region
      %30 = vsyncadd [#allocation6], 0
      %s31 = sshll.u32 %s1, 4
      %s32 = int_to_ptr.hbm [resolvable:$true] %s31
      %s33 = sshll.u32 [#allocation5], 4
      %s34 = int_to_ptr.vmem [resolvable:$true] %s33
      %39 = dma.hbm_to_vmem [thread:$0]  %s32, 32768, %s34, [#allocation6], 256, 256, 16
    $region9: #{tpu_custom_call.1} parent=1 // pred_fallthru
      _
    // Predicated region
    $region10: #{tpu_custom_call.1} parent=1 // pred_check
      _
    $region11: #{tpu_custom_call.1} parent=1 // pred_check_branch
      %41 = sbr.rel (0) target = $region13
    $region12: #{tpu_custom_call.1} parent=1 // pred_region
      %43 = vsyncadd [#allocation6], 0
      %s45 = sshll.u32 %s2, 4
      %s46 = int_to_ptr.hbm [resolvable:$true] %s45
      %s47 = sshll.u32 [#allocation7], 4
      %s48 = int_to_ptr.vmem [resolvable:$true] %s47
      %50 = dma.hbm_to_vmem [thread:$0]  %s46, 32, %s48, [#allocation6]
    $region13: #{tpu_custom_call.1} parent=1 // pred_fallthru
      _
    // Predicated region
    $region14: #{tpu_custom_call.1} parent=1 // pred_check
      _
    $region15: #{tpu_custom_call.1} parent=1 // pred_check_branch
      %52 = sbr.rel (0) target = $region17
    $region16: #{tpu_custom_call.1} parent=1 // pred_region
      %54 = vsyncadd [#allocation9], 0
      %s55 = sshll.u32 %s3, 4
      %s56 = int_to_ptr.hbm [resolvable:$true] %s55
      %s57 = sshll.u32 [#allocation8], 4
      %s58 = int_to_ptr.vmem [resolvable:$true] %s57
      %63 = dma.hbm_to_vmem [thread:$0]  %s56, 8192, %s58, [#allocation9], 256, 256, 16
    $region17: #{tpu_custom_call.1} parent=1 // pred_fallthru
      _
    // Predicated region
    $region18: #{tpu_custom_call.1} parent=1 // pred_check
      _
    $region19: #{tpu_custom_call.1} parent=1 // pred_check_branch
      %65 = sbr.rel (0) target = $region21
    $region20: #{tpu_custom_call.1} parent=1 // pred_region
      _
    $region21: #{tpu_custom_call.1} parent=1 // pred_fallthru
      _
    // Predicated region
    $region22: #{tpu_custom_call.1} parent=1 // pred_check
      _
    $region23: #{tpu_custom_call.1} parent=1 // pred_check_branch
      %67 = sbr.rel (0) target = $region25
    $region24: #{tpu_custom_call.1} parent=1 // pred_region
      %69 = vsyncadd [#allocation9], 0
      %s70 = sshll.u32 %s5, 4
      %s71 = int_to_ptr.hbm [resolvable:$true] %s70
      %s72 = sshll.u32 [#allocation10], 4
      %s73 = int_to_ptr.vmem [resolvable:$true] %s72
      %78 = dma.hbm_to_vmem [thread:$0]  %s71, 4096, %s73, [#allocation9], 128, 128, 8
    $region25: #{tpu_custom_call.1} parent=1 // pred_fallthru
      _
    // Predicated region
    $region26: #{tpu_custom_call.1} parent=1 // pred_check
      _
    $region27: #{tpu_custom_call.1} parent=1 // pred_check_branch
      %80 = sbr.rel (0) target = $region29
    $region28: #{tpu_custom_call.1} parent=1 // pred_region
      _
    $region29: #{tpu_custom_call.1} parent=1 // pred_fallthru
      _
    // Predicated region
    $region30: #{tpu_custom_call.1} parent=1 // pred_check
      _
    $region31: #{tpu_custom_call.1} parent=1 // pred_check_branch
      %82 = sbr.rel (0) target = $region33
    $region32: #{tpu_custom_call.1} parent=1 // pred_region
      %84 = dma.done [#allocation3], 128
    $region33: #{tpu_custom_call.1} parent=1 // pred_fallthru
      _
    // Predicated region
    $region34: #{tpu_custom_call.1} parent=1 // pred_check
      _
    $region35: #{tpu_custom_call.1} parent=1 // pred_check_branch
      %86 = sbr.rel (0) target = $region37
    $region36: #{tpu_custom_call.1} parent=1 // pred_region
      %88 = dma.done [#allocation6], 32768
    $region37: #{tpu_custom_call.1} parent=1 // pred_fallthru
      _
    // Predicated region
    $region38: #{tpu_custom_call.1} parent=1 // pred_check
      _
    $region39: #{tpu_custom_call.1} parent=1 // pred_check_branch
      %90 = sbr.rel (0) target = $region41
    $region40: #{tpu_custom_call.1} parent=1 // pred_region
      %92 = dma.done [#allocation6], 32
    $region41: #{tpu_custom_call.1} parent=1 // pred_fallthru
      _
    // Predicated region
    $region42: #{tpu_custom_call.1} parent=1 // pred_check
      _
    $region43: #{tpu_custom_call.1} parent=1 // pred_check_branch
      %94 = sbr.rel (0) target = $region45
    $region44: #{tpu_custom_call.1} parent=1 // pred_region
      %96 = dma.done [#allocation9], 8192
    $region45: #{tpu_custom_call.1} parent=1 // pred_fallthru
      _
    // Predicated region
    $region46: #{tpu_custom_call.1} parent=1 // pred_check
      _
    $region47: #{tpu_custom_call.1} parent=1 // pred_check_branch
      %98 = sbr.rel (0) target = $region49
    $region48: #{tpu_custom_call.1} parent=1 // pred_region
      %100 = dma.done [#allocation9], 4096
    $region49: #{tpu_custom_call.1} parent=1 // pred_fallthru
      _
    %v101 = vld [vmem:[#allocation2] sm:$0xff]
    %v102 = vld [vmem:[#allocation5] sm:$0xff]
    %v103 = vld [vmem:[#allocation5 + $0x8] sm:$0xff]
    %v104 = vld [vmem:[#allocation5 + $0x10] sm:$0xff]
    %v105 = vld [vmem:[#allocation5 + $0x18] sm:$0xff]
    %v106 = vld [vmem:[#allocation5 + $0x20] sm:$0xff]
    %v107 = vld [vmem:[#allocation5 + $0x28] sm:$0xff]
    %v108 = vld [vmem:[#allocation5 + $0x30] sm:$0xff]
    %v109 = vld [vmem:[#allocation5 + $0x38] sm:$0xff]
    %v110 = vld [vmem:[#allocation5 + $0x40] sm:$0xff]
    %v111 = vld [vmem:[#allocation5 + $0x48] sm:$0xff]
    %v112 = vld [vmem:[#allocation5 + $0x50] sm:$0xff]
    %v113 = vld [vmem:[#allocation5 + $0x58] sm:$0xff]
    %v114 = vld [vmem:[#allocation5 + $0x60] sm:$0xff]
    %v115 = vld [vmem:[#allocation5 + $0x68] sm:$0xff]
    %v116 = vld [vmem:[#allocation5 + $0x70] sm:$0xff]
    %v117 = vld [vmem:[#allocation5 + $0x78] sm:$0xff]
    %v118 = vld [vmem:[#allocation5 + $0x80] sm:$0xff]
    %v119 = vld [vmem:[#allocation5 + $0x88] sm:$0xff]
    %v120 = vld [vmem:[#allocation5 + $0x90] sm:$0xff]
    %v121 = vld [vmem:[#allocation5 + $0x98] sm:$0xff]
    %v122 = vld [vmem:[#allocation5 + $0xa0] sm:$0xff]
    %v123 = vld [vmem:[#allocation5 + $0xa8] sm:$0xff]
    %v124 = vld [vmem:[#allocation5 + $0xb0] sm:$0xff]
    %v125 = vld [vmem:[#allocation5 + $0xb8] sm:$0xff]
    %v126 = vld [vmem:[#allocation5 + $0xc0] sm:$0xff]
    %v127 = vld [vmem:[#allocation5 + $0xc8] sm:$0xff]
    %v128 = vld [vmem:[#allocation5 + $0xd0] sm:$0xff]
    %v129 = vld [vmem:[#allocation5 + $0xd8] sm:$0xff]
    %v130 = vld [vmem:[#allocation5 + $0xe0] sm:$0xff]
    %v131 = vld [vmem:[#allocation5 + $0xe8] sm:$0xff]
    %v132 = vld [vmem:[#allocation5 + $0xf0] sm:$0xff]
    %v133 = vld [vmem:[#allocation5 + $0xf8] sm:$0xff]
    %v134 = vld [vmem:[#allocation5 + $0x100] sm:$0xff]
    %v135 = vld [vmem:[#allocation5 + $0x108] sm:$0xff]
    %v136 = vld [vmem:[#allocation5 + $0x110] sm:$0xff]
    %v137 = vld [vmem:[#allocation5 + $0x118] sm:$0xff]
    %v138 = vld [vmem:[#allocation5 + $0x120] sm:$0xff]
    %v139 = vld [vmem:[#allocation5 + $0x128] sm:$0xff]
    %v140 = vld [vmem:[#allocation5 + $0x130] sm:$0xff]
    %v141 = vld [vmem:[#allocation5 + $0x138] sm:$0xff]
    %v142 = vld [vmem:[#allocation5 + $0x140] sm:$0xff]
    %v143 = vld [vmem:[#allocation5 + $0x148] sm:$0xff]
    %v144 = vld [vmem:[#allocation5 + $0x150] sm:$0xff]
    %v145 = vld [vmem:[#allocation5 + $0x158] sm:$0xff]
    %v146 = vld [vmem:[#allocation5 + $0x160] sm:$0xff]
    %v147 = vld [vmem:[#allocation5 + $0x168] sm:$0xff]
    %v148 = vld [vmem:[#allocation5 + $0x170] sm:$0xff]
    %v149 = vld [vmem:[#allocation5 + $0x178] sm:$0xff]
    %v150 = vld [vmem:[#allocation5 + $0x180] sm:$0xff]
    %v151 = vld [vmem:[#allocation5 + $0x188] sm:$0xff]
    %v152 = vld [vmem:[#allocation5 + $0x190] sm:$0xff]
    %v153 = vld [vmem:[#allocation5 + $0x198] sm:$0xff]
    %v154 = vld [vmem:[#allocation5 + $0x1a0] sm:$0xff]
    %v155 = vld [vmem:[#allocation5 + $0x1a8] sm:$0xff]
    %v156 = vld [vmem:[#allocation5 + $0x1b0] sm:$0xff]
    %v157 = vld [vmem:[#allocation5 + $0x1b8] sm:$0xff]
    %v158 = vld [vmem:[#allocation5 + $0x1c0] sm:$0xff]
    %v159 = vld [vmem:[#allocation5 + $0x1c8] sm:$0xff]
    %v160 = vld [vmem:[#allocation5 + $0x1d0] sm:$0xff]
    %v161 = vld [vmem:[#allocation5 + $0x1d8] sm:$0xff]
    %v162 = vld [vmem:[#allocation5 + $0x1e0] sm:$0xff]
    %v163 = vld [vmem:[#allocation5 + $0x1e8] sm:$0xff]
    %v164 = vld [vmem:[#allocation5 + $0x1f0] sm:$0xff]
    %v165 = vld [vmem:[#allocation5 + $0x1f8] sm:$0xff]
    %v166 = vld [vmem:[#allocation5 + $0x200] sm:$0xff]
    %v167 = vld [vmem:[#allocation5 + $0x208] sm:$0xff]
    %v168 = vld [vmem:[#allocation5 + $0x210] sm:$0xff]
    %v169 = vld [vmem:[#allocation5 + $0x218] sm:$0xff]
    %v170 = vld [vmem:[#allocation5 + $0x220] sm:$0xff]
    %v171 = vld [vmem:[#allocation5 + $0x228] sm:$0xff]
    %v172 = vld [vmem:[#allocation5 + $0x230] sm:$0xff]
    %v173 = vld [vmem:[#allocation5 + $0x238] sm:$0xff]
    %v174 = vld [vmem:[#allocation5 + $0x240] sm:$0xff]
    %v175 = vld [vmem:[#allocation5 + $0x248] sm:$0xff]
    %v176 = vld [vmem:[#allocation5 + $0x250] sm:$0xff]
    %v177 = vld [vmem:[#allocation5 + $0x258] sm:$0xff]
    %v178 = vld [vmem:[#allocation5 + $0x260] sm:$0xff]
    %v179 = vld [vmem:[#allocation5 + $0x268] sm:$0xff]
    %v180 = vld [vmem:[#allocation5 + $0x270] sm:$0xff]
    %v181 = vld [vmem:[#allocation5 + $0x278] sm:$0xff]
    %v182 = vld [vmem:[#allocation5 + $0x280] sm:$0xff]
    %v183 = vld [vmem:[#allocation5 + $0x288] sm:$0xff]
    %v184 = vld [vmem:[#allocation5 + $0x290] sm:$0xff]
    %v185 = vld [vmem:[#allocation5 + $0x298] sm:$0xff]
    %v186 = vld [vmem:[#allocation5 + $0x2a0] sm:$0xff]
    %v187 = vld [vmem:[#allocation5 + $0x2a8] sm:$0xff]
    %v188 = vld [vmem:[#allocation5 + $0x2b0] sm:$0xff]
    %v189 = vld [vmem:[#allocation5 + $0x2b8] sm:$0xff]
    %v190 = vld [vmem:[#allocation5 + $0x2c0] sm:$0xff]
    %v191 = vld [vmem:[#allocation5 + $0x2c8] sm:$0xff]
    %v192 = vld [vmem:[#allocation5 + $0x2d0] sm:$0xff]
    %v193 = vld [vmem:[#allocation5 + $0x2d8] sm:$0xff]
    %v194 = vld [vmem:[#allocation5 + $0x2e0] sm:$0xff]
    %v195 = vld [vmem:[#allocation5 + $0x2e8] sm:$0xff]
    %v196 = vld [vmem:[#allocation5 + $0x2f0] sm:$0xff]
    %v197 = vld [vmem:[#allocation5 + $0x2f8] sm:$0xff]
    %v198 = vld [vmem:[#allocation5 + $0x300] sm:$0xff]
    %v199 = vld [vmem:[#allocation5 + $0x308] sm:$0xff]
    %v200 = vld [vmem:[#allocation5 + $0x310] sm:$0xff]
    %v201 = vld [vmem:[#allocation5 + $0x318] sm:$0xff]
    %v202 = vld [vmem:[#allocation5 + $0x320] sm:$0xff]
    %v203 = vld [vmem:[#allocation5 + $0x328] sm:$0xff]
    %v204 = vld [vmem:[#allocation5 + $0x330] sm:$0xff]
    %v205 = vld [vmem:[#allocation5 + $0x338] sm:$0xff]
    %v206 = vld [vmem:[#allocation5 + $0x340] sm:$0xff]
    %v207 = vld [vmem:[#allocation5 + $0x348] sm:$0xff]
    %v208 = vld [vmem:[#allocation5 + $0x350] sm:$0xff]
    %v209 = vld [vmem:[#allocation5 + $0x358] sm:$0xff]
    %v210 = vld [vmem:[#allocation5 + $0x360] sm:$0xff]
    %v211 = vld [vmem:[#allocation5 + $0x368] sm:$0xff]
    %v212 = vld [vmem:[#allocation5 + $0x370] sm:$0xff]
    %v213 = vld [vmem:[#allocation5 + $0x378] sm:$0xff]
    %v214 = vld [vmem:[#allocation5 + $0x380] sm:$0xff]
    %v215 = vld [vmem:[#allocation5 + $0x388] sm:$0xff]
    %v216 = vld [vmem:[#allocation5 + $0x390] sm:$0xff]
    %v217 = vld [vmem:[#allocation5 + $0x398] sm:$0xff]
    %v218 = vld [vmem:[#allocation5 + $0x3a0] sm:$0xff]
    %v219 = vld [vmem:[#allocation5 + $0x3a8] sm:$0xff]
    %v220 = vld [vmem:[#allocation5 + $0x3b0] sm:$0xff]
    %v221 = vld [vmem:[#allocation5 + $0x3b8] sm:$0xff]
    %v222 = vld [vmem:[#allocation5 + $0x3c0] sm:$0xff]
    %v223 = vld [vmem:[#allocation5 + $0x3c8] sm:$0xff]
    %v224 = vld [vmem:[#allocation5 + $0x3d0] sm:$0xff]
    %v225 = vld [vmem:[#allocation5 + $0x3d8] sm:$0xff]
    %v226 = vld [vmem:[#allocation5 + $0x3e0] sm:$0xff]
    %v227 = vld [vmem:[#allocation5 + $0x3e8] sm:$0xff]
    %v228 = vld [vmem:[#allocation5 + $0x3f0] sm:$0xff]
    %v229 = vld [vmem:[#allocation5 + $0x3f8] sm:$0xff]
    %v230 = vld [vmem:[#allocation5 + $0x400] sm:$0xff]
    %v231 = vld [vmem:[#allocation5 + $0x408] sm:$0xff]
    %v232 = vld [vmem:[#allocation5 + $0x410] sm:$0xff]
    %v233 = vld [vmem:[#allocation5 + $0x418] sm:$0xff]
    %v234 = vld [vmem:[#allocation5 + $0x420] sm:$0xff]
    %v235 = vld [vmem:[#allocation5 + $0x428] sm:$0xff]
    %v236 = vld [vmem:[#allocation5 + $0x430] sm:$0xff]
    %v237 = vld [vmem:[#allocation5 + $0x438] sm:$0xff]
    %v238 = vld [vmem:[#allocation5 + $0x440] sm:$0xff]
    %v239 = vld [vmem:[#allocation5 + $0x448] sm:$0xff]
    %v240 = vld [vmem:[#allocation5 + $0x450] sm:$0xff]
    %v241 = vld [vmem:[#allocation5 + $0x458] sm:$0xff]
    %v242 = vld [vmem:[#allocation5 + $0x460] sm:$0xff]
    %v243 = vld [vmem:[#allocation5 + $0x468] sm:$0xff]
    %v244 = vld [vmem:[#allocation5 + $0x470] sm:$0xff]
    %v245 = vld [vmem:[#allocation5 + $0x478] sm:$0xff]
    %v246 = vld [vmem:[#allocation5 + $0x480] sm:$0xff]
    %v247 = vld [vmem:[#allocation5 + $0x488] sm:$0xff]
    %v248 = vld [vmem:[#allocation5 + $0x490] sm:$0xff]
    %v249 = vld [vmem:[#allocation5 + $0x498] sm:$0xff]
    %v250 = vld [vmem:[#allocation5 + $0x4a0] sm:$0xff]
    %v251 = vld [vmem:[#allocation5 + $0x4a8] sm:$0xff]
    %v252 = vld [vmem:[#allocation5 + $0x4b0] sm:$0xff]
    %v253 = vld [vmem:[#allocation5 + $0x4b8] sm:$0xff]
    %v254 = vld [vmem:[#allocation5 + $0x4c0] sm:$0xff]
    %v255 = vld [vmem:[#allocation5 + $0x4c8] sm:$0xff]
    %v256 = vld [vmem:[#allocation5 + $0x4d0] sm:$0xff]
    %v257 = vld [vmem:[#allocation5 + $0x4d8] sm:$0xff]
    %v258 = vld [vmem:[#allocation5 + $0x4e0] sm:$0xff]
    %v259 = vld [vmem:[#allocation5 + $0x4e8] sm:$0xff]
    %v260 = vld [vmem:[#allocation5 + $0x4f0] sm:$0xff]
    %v261 = vld [vmem:[#allocation5 + $0x4f8] sm:$0xff]
    %v262 = vld [vmem:[#allocation5 + $0x500] sm:$0xff]
    %v263 = vld [vmem:[#allocation5 + $0x508] sm:$0xff]
    %v264 = vld [vmem:[#allocation5 + $0x510] sm:$0xff]
    %v265 = vld [vmem:[#allocation5 + $0x518] sm:$0xff]
    %v266 = vld [vmem:[#allocation5 + $0x520] sm:$0xff]
    %v267 = vld [vmem:[#allocation5 + $0x528] sm:$0xff]
    %v268 = vld [vmem:[#allocation5 + $0x530] sm:$0xff]
    %v269 = vld [vmem:[#allocation5 + $0x538] sm:$0xff]
    %v270 = vld [vmem:[#allocation5 + $0x540] sm:$0xff]
    %v271 = vld [vmem:[#allocation5 + $0x548] sm:$0xff]
    %v272 = vld [vmem:[#allocation5 + $0x550] sm:$0xff]
    %v273 = vld [vmem:[#allocation5 + $0x558] sm:$0xff]
    %v274 = vld [vmem:[#allocation5 + $0x560] sm:$0xff]
    %v275 = vld [vmem:[#allocation5 + $0x568] sm:$0xff]
    %v276 = vld [vmem:[#allocation5 + $0x570] sm:$0xff]
    %v277 = vld [vmem:[#allocation5 + $0x578] sm:$0xff]
    %v278 = vld [vmem:[#allocation5 + $0x580] sm:$0xff]
    %v279 = vld [vmem:[#allocation5 + $0x588] sm:$0xff]
    %v280 = vld [vmem:[#allocation5 + $0x590] sm:$0xff]
    %v281 = vld [vmem:[#allocation5 + $0x598] sm:$0xff]
    %v282 = vld [vmem:[#allocation5 + $0x5a0] sm:$0xff]
    %v283 = vld [vmem:[#allocation5 + $0x5a8] sm:$0xff]
    %v284 = vld [vmem:[#allocation5 + $0x5b0] sm:$0xff]
    %v285 = vld [vmem:[#allocation5 + $0x5b8] sm:$0xff]
    %v286 = vld [vmem:[#allocation5 + $0x5c0] sm:$0xff]
    %v287 = vld [vmem:[#allocation5 + $0x5c8] sm:$0xff]
    %v288 = vld [vmem:[#allocation5 + $0x5d0] sm:$0xff]
    %v289 = vld [vmem:[#allocation5 + $0x5d8] sm:$0xff]
    %v290 = vld [vmem:[#allocation5 + $0x5e0] sm:$0xff]
    %v291 = vld [vmem:[#allocation5 + $0x5e8] sm:$0xff]
    %v292 = vld [vmem:[#allocation5 + $0x5f0] sm:$0xff]
    %v293 = vld [vmem:[#allocation5 + $0x5f8] sm:$0xff]
    %v294 = vld [vmem:[#allocation5 + $0x600] sm:$0xff]
    %v295 = vld [vmem:[#allocation5 + $0x608] sm:$0xff]
    %v296 = vld [vmem:[#allocation5 + $0x610] sm:$0xff]
    %v297 = vld [vmem:[#allocation5 + $0x618] sm:$0xff]
    %v298 = vld [vmem:[#allocation5 + $0x620] sm:$0xff]
    %v299 = vld [vmem:[#allocation5 + $0x628] sm:$0xff]
    %v300 = vld [vmem:[#allocation5 + $0x630] sm:$0xff]
    %v301 = vld [vmem:[#allocation5 + $0x638] sm:$0xff]
    %v302 = vld [vmem:[#allocation5 + $0x640] sm:$0xff]
    %v303 = vld [vmem:[#allocation5 + $0x648] sm:$0xff]
    %v304 = vld [vmem:[#allocation5 + $0x650] sm:$0xff]
    %v305 = vld [vmem:[#allocation5 + $0x658] sm:$0xff]
    %v306 = vld [vmem:[#allocation5 + $0x660] sm:$0xff]
    %v307 = vld [vmem:[#allocation5 + $0x668] sm:$0xff]
    %v308 = vld [vmem:[#allocation5 + $0x670] sm:$0xff]
    %v309 = vld [vmem:[#allocation5 + $0x678] sm:$0xff]
    %v310 = vld [vmem:[#allocation5 + $0x680] sm:$0xff]
    %v311 = vld [vmem:[#allocation5 + $0x688] sm:$0xff]
    %v312 = vld [vmem:[#allocation5 + $0x690] sm:$0xff]
    %v313 = vld [vmem:[#allocation5 + $0x698] sm:$0xff]
    %v314 = vld [vmem:[#allocation5 + $0x6a0] sm:$0xff]
    %v315 = vld [vmem:[#allocation5 + $0x6a8] sm:$0xff]
    %v316 = vld [vmem:[#allocation5 + $0x6b0] sm:$0xff]
    %v317 = vld [vmem:[#allocation5 + $0x6b8] sm:$0xff]
    %v318 = vld [vmem:[#allocation5 + $0x6c0] sm:$0xff]
    %v319 = vld [vmem:[#allocation5 + $0x6c8] sm:$0xff]
    %v320 = vld [vmem:[#allocation5 + $0x6d0] sm:$0xff]
    %v321 = vld [vmem:[#allocation5 + $0x6d8] sm:$0xff]
    %v322 = vld [vmem:[#allocation5 + $0x6e0] sm:$0xff]
    %v323 = vld [vmem:[#allocation5 + $0x6e8] sm:$0xff]
    %v324 = vld [vmem:[#allocation5 + $0x6f0] sm:$0xff]
    %v325 = vld [vmem:[#allocation5 + $0x6f8] sm:$0xff]
    %v326 = vld [vmem:[#allocation5 + $0x700] sm:$0xff]
    %v327 = vld [vmem:[#allocation5 + $0x708] sm:$0xff]
    %v328 = vld [vmem:[#allocation5 + $0x710] sm:$0xff]
    %v329 = vld [vmem:[#allocation5 + $0x718] sm:$0xff]
    %v330 = vld [vmem:[#allocation5 + $0x720] sm:$0xff]
    %v331 = vld [vmem:[#allocation5 + $0x728] sm:$0xff]
    %v332 = vld [vmem:[#allocation5 + $0x730] sm:$0xff]
    %v333 = vld [vmem:[#allocation5 + $0x738] sm:$0xff]
    %v334 = vld [vmem:[#allocation5 + $0x740] sm:$0xff]
    %v335 = vld [vmem:[#allocation5 + $0x748] sm:$0xff]
    %v336 = vld [vmem:[#allocation5 + $0x750] sm:$0xff]
    %v337 = vld [vmem:[#allocation5 + $0x758] sm:$0xff]
    %v338 = vld [vmem:[#allocation5 + $0x760] sm:$0xff]
    %v339 = vld [vmem:[#allocation5 + $0x768] sm:$0xff]
    %v340 = vld [vmem:[#allocation5 + $0x770] sm:$0xff]
    %v341 = vld [vmem:[#allocation5 + $0x778] sm:$0xff]
    %v342 = vld [vmem:[#allocation5 + $0x780] sm:$0xff]
    %v343 = vld [vmem:[#allocation5 + $0x788] sm:$0xff]
    %v344 = vld [vmem:[#allocation5 + $0x790] sm:$0xff]
    %v345 = vld [vmem:[#allocation5 + $0x798] sm:$0xff]
    %v346 = vld [vmem:[#allocation5 + $0x7a0] sm:$0xff]
    %v347 = vld [vmem:[#allocation5 + $0x7a8] sm:$0xff]
    %v348 = vld [vmem:[#allocation5 + $0x7b0] sm:$0xff]
    %v349 = vld [vmem:[#allocation5 + $0x7b8] sm:$0xff]
    %v350 = vld [vmem:[#allocation5 + $0x7c0] sm:$0xff]
    %v351 = vld [vmem:[#allocation5 + $0x7c8] sm:$0xff]
    %v352 = vld [vmem:[#allocation5 + $0x7d0] sm:$0xff]
    %v353 = vld [vmem:[#allocation5 + $0x7d8] sm:$0xff]
    %v354 = vld [vmem:[#allocation5 + $0x7e0] sm:$0xff]
    %v355 = vld [vmem:[#allocation5 + $0x7e8] sm:$0xff]
    %v356 = vld [vmem:[#allocation5 + $0x7f0] sm:$0xff]
    %v357 = vld [vmem:[#allocation5 + $0x7f8] sm:$0xff]
    %v358 = vld [vmem:[#allocation7] sm:$0x3]
    %v360 = vperm.slane %v101, 0
    %v361 = vperm.slane %v101, 1
    %v362 = vperm.slane %v101, 2
    %v363 = vperm.slane %v101, 3
    %v364 = vperm.slane %v101, 4
    %v365 = vperm.slane %v101, 5
    %v366 = vperm.slane %v101, 6
    %v367 = vperm.slane %v101, 7
    %v377 = vperm.slane %v358, 0
    %v378 = vperm.slane %v358, 1
    %381 = vmatpush.msra.mxu0 %v132
    %382 = vmatpush.msra.mxu0 %v130
    %383 = vmatpush.msra.mxu0 %v128
    %384 = vmatpush.msra.mxu0 %v126
    %385 = vmatpush.msra.mxu0 %v124
    %386 = vmatpush.msra.mxu0 %v122
    %387 = vmatpush.msra.mxu0 %v120
    %388 = vmatpush.msra.mxu0 %v118
    %389 = vmatpush.msra.mxu0 %v116
    %390 = vmatpush.msra.mxu0 %v114
    %391 = vmatpush.msra.mxu0 %v112
    %392 = vmatpush.msra.mxu0 %v110
    %393 = vmatpush.msra.mxu0 %v108
    %394 = vmatpush.msra.mxu0 %v106
    %395 = vmatpush.msra.mxu0 %v104
    %396 = vmatpush.msra.mxu0 %v102
    %397 = vmatmul.f32.gmra.mxu0 %v360
    %v398 = vpop.f32.mrf.mxu0
    %v399 = vadd.f32 %v377, %v398
    %400 = vdwg.mxu0
    %401 = vmatpush.msra.mxu0 %v164
    %402 = vmatpush.msra.mxu0 %v162
    %403 = vmatpush.msra.mxu0 %v160
    %404 = vmatpush.msra.mxu0 %v158
    %405 = vmatpush.msra.mxu0 %v156
    %406 = vmatpush.msra.mxu0 %v154
    %407 = vmatpush.msra.mxu0 %v152
    %408 = vmatpush.msra.mxu0 %v150
    %409 = vmatpush.msra.mxu0 %v148
    %410 = vmatpush.msra.mxu0 %v146
    %411 = vmatpush.msra.mxu0 %v144
    %412 = vmatpush.msra.mxu0 %v142
    %413 = vmatpush.msra.mxu0 %v140
    %414 = vmatpush.msra.mxu0 %v138
    %415 = vmatpush.msra.mxu0 %v136
    %416 = vmatpush.msra.mxu0 %v134
    %417 = vmatmul.f32.gmra.mxu0 %v361
    %v418 = vpop.f32.mrf.mxu0
    %v419 = vadd.f32 %v399, %v418
    %420 = vdwg.mxu0
    %421 = vmatpush.msra.mxu0 %v196
    %422 = vmatpush.msra.mxu0 %v194
    %423 = vmatpush.msra.mxu0 %v192
    %424 = vmatpush.msra.mxu0 %v190
    %425 = vmatpush.msra.mxu0 %v188
    %426 = vmatpush.msra.mxu0 %v186
    %427 = vmatpush.msra.mxu0 %v184
    %428 = vmatpush.msra.mxu0 %v182
    %429 = vmatpush.msra.mxu0 %v180
    %430 = vmatpush.msra.mxu0 %v178
    %431 = vmatpush.msra.mxu0 %v176
    %432 = vmatpush.msra.mxu0 %v174
    %433 = vmatpush.msra.mxu0 %v172
    %434 = vmatpush.msra.mxu0 %v170
    %435 = vmatpush.msra.mxu0 %v168
    %436 = vmatpush.msra.mxu0 %v166
    %437 = vmatmul.f32.gmra.mxu0 %v362
    %v438 = vpop.f32.mrf.mxu0
    %v439 = vadd.f32 %v419, %v438
    %440 = vdwg.mxu0
    %441 = vmatpush.msra.mxu0 %v228
    %442 = vmatpush.msra.mxu0 %v226
    %443 = vmatpush.msra.mxu0 %v224
    %444 = vmatpush.msra.mxu0 %v222
    %445 = vmatpush.msra.mxu0 %v220
    %446 = vmatpush.msra.mxu0 %v218
    %447 = vmatpush.msra.mxu0 %v216
    %448 = vmatpush.msra.mxu0 %v214
    %449 = vmatpush.msra.mxu0 %v212
    %450 = vmatpush.msra.mxu0 %v210
    %451 = vmatpush.msra.mxu0 %v208
    %452 = vmatpush.msra.mxu0 %v206
    %453 = vmatpush.msra.mxu0 %v204
    %454 = vmatpush.msra.mxu0 %v202
    %455 = vmatpush.msra.mxu0 %v200
    %456 = vmatpush.msra.mxu0 %v198
    %457 = vmatmul.f32.gmra.mxu0 %v363
    %v458 = vpop.f32.mrf.mxu0
    %v459 = vadd.f32 %v439, %v458
    %460 = vdwg.mxu0
    %461 = vmatpush.msra.mxu0 %v260
    %462 = vmatpush.msra.mxu0 %v258
    %463 = vmatpush.msra.mxu0 %v256
    %464 = vmatpush.msra.mxu0 %v254
    %465 = vmatpush.msra.mxu0 %v252
    %466 = vmatpush.msra.mxu0 %v250
    %467 = vmatpush.msra.mxu0 %v248
    %468 = vmatpush.msra.mxu0 %v246
    %469 = vmatpush.msra.mxu0 %v244
    %470 = vmatpush.msra.mxu0 %v242
    %471 = vmatpush.msra.mxu0 %v240
    %472 = vmatpush.msra.mxu0 %v238
    %473 = vmatpush.msra.mxu0 %v236
    %474 = vmatpush.msra.mxu0 %v234
    %475 = vmatpush.msra.mxu0 %v232
    %476 = vmatpush.msra.mxu0 %v230
    %477 = vmatmul.f32.gmra.mxu0 %v364
    %v478 = vpop.f32.mrf.mxu0
    %v479 = vadd.f32 %v459, %v478
    %480 = vdwg.mxu0
    %481 = vmatpush.msra.mxu0 %v292
    %482 = vmatpush.msra.mxu0 %v290
    %483 = vmatpush.msra.mxu0 %v288
    %484 = vmatpush.msra.mxu0 %v286
    %485 = vmatpush.msra.mxu0 %v284
    %486 = vmatpush.msra.mxu0 %v282
    %487 = vmatpush.msra.mxu0 %v280
    %488 = vmatpush.msra.mxu0 %v278
    %489 = vmatpush.msra.mxu0 %v276
    %490 = vmatpush.msra.mxu0 %v274
    %491 = vmatpush.msra.mxu0 %v272
    %492 = vmatpush.msra.mxu0 %v270
    %493 = vmatpush.msra.mxu0 %v268
    %494 = vmatpush.msra.mxu0 %v266
    %495 = vmatpush.msra.mxu0 %v264
    %496 = vmatpush.msra.mxu0 %v262
    %497 = vmatmul.f32.gmra.mxu0 %v365
    %v498 = vpop.f32.mrf.mxu0
    %v499 = vadd.f32 %v479, %v498
    %500 = vdwg.mxu0
    %501 = vmatpush.msra.mxu0 %v324
    %502 = vmatpush.msra.mxu0 %v322
    %503 = vmatpush.msra.mxu0 %v320
    %504 = vmatpush.msra.mxu0 %v318
    %505 = vmatpush.msra.mxu0 %v316
    %506 = vmatpush.msra.mxu0 %v314
    %507 = vmatpush.msra.mxu0 %v312
    %508 = vmatpush.msra.mxu0 %v310
    %509 = vmatpush.msra.mxu0 %v308
    %510 = vmatpush.msra.mxu0 %v306
    %511 = vmatpush.msra.mxu0 %v304
    %512 = vmatpush.msra.mxu0 %v302
    %513 = vmatpush.msra.mxu0 %v300
    %514 = vmatpush.msra.mxu0 %v298
    %515 = vmatpush.msra.mxu0 %v296
    %516 = vmatpush.msra.mxu0 %v294
    %517 = vmatmul.f32.gmra.mxu0 %v366
    %v518 = vpop.f32.mrf.mxu0
    %v519 = vadd.f32 %v499, %v518
    %520 = vdwg.mxu0
    %521 = vmatpush.msra.mxu0 %v356
    %522 = vmatpush.msra.mxu0 %v354
    %523 = vmatpush.msra.mxu0 %v352
    %524 = vmatpush.msra.mxu0 %v350
    %525 = vmatpush.msra.mxu0 %v348
    %526 = vmatpush.msra.mxu0 %v346
    %527 = vmatpush.msra.mxu0 %v344
    %528 = vmatpush.msra.mxu0 %v342
    %529 = vmatpush.msra.mxu0 %v340
    %530 = vmatpush.msra.mxu0 %v338
    %531 = vmatpush.msra.mxu0 %v336
    %532 = vmatpush.msra.mxu0 %v334
    %533 = vmatpush.msra.mxu0 %v332
    %534 = vmatpush.msra.mxu0 %v330
    %535 = vmatpush.msra.mxu0 %v328
    %536 = vmatpush.msra.mxu0 %v326
    %537 = vmatmul.f32.gmra.mxu0 %v367
    %v538 = vpop.f32.mrf.mxu0
    %v539 = vadd.f32 %v519, %v538
    %540 = vdwg.mxu0
    %541 = vmatpush.msra.mxu0 %v133
    %542 = vmatpush.msra.mxu0 %v131
    %543 = vmatpush.msra.mxu0 %v129
    %544 = vmatpush.msra.mxu0 %v127
    %545 = vmatpush.msra.mxu0 %v125
    %546 = vmatpush.msra.mxu0 %v123
    %547 = vmatpush.msra.mxu0 %v121
    %548 = vmatpush.msra.mxu0 %v119
    %549 = vmatpush.msra.mxu0 %v117
    %550 = vmatpush.msra.mxu0 %v115
    %551 = vmatpush.msra.mxu0 %v113
    %552 = vmatpush.msra.mxu0 %v111
    %553 = vmatpush.msra.mxu0 %v109
    %554 = vmatpush.msra.mxu0 %v107
    %555 = vmatpush.msra.mxu0 %v105
    %556 = vmatpush.msra.mxu0 %v103
    %557 = vmatmul.f32.gmra.mxu0 %v360
    %v558 = vpop.f32.mrf.mxu0
    %v559 = vadd.f32 %v378, %v558
    %560 = vdwg.mxu0
    %561 = vmatpush.msra.mxu0 %v165
    %562 = vmatpush.msra.mxu0 %v163
    %563 = vmatpush.msra.mxu0 %v161
    %564 = vmatpush.msra.mxu0 %v159
    %565 = vmatpush.msra.mxu0 %v157
    %566 = vmatpush.msra.mxu0 %v155
    %567 = vmatpush.msra.mxu0 %v153
    %568 = vmatpush.msra.mxu0 %v151
    %569 = vmatpush.msra.mxu0 %v149
    %570 = vmatpush.msra.mxu0 %v147
    %571 = vmatpush.msra.mxu0 %v145
    %572 = vmatpush.msra.mxu0 %v143
    %573 = vmatpush.msra.mxu0 %v141
    %574 = vmatpush.msra.mxu0 %v139
    %575 = vmatpush.msra.mxu0 %v137
    %576 = vmatpush.msra.mxu0 %v135
    %577 = vmatmul.f32.gmra.mxu0 %v361
    %v578 = vpop.f32.mrf.mxu0
    %v579 = vadd.f32 %v559, %v578
    %580 = vdwg.mxu0
    %581 = vmatpush.msra.mxu0 %v197
    %582 = vmatpush.msra.mxu0 %v195
    %583 = vmatpush.msra.mxu0 %v193
    %584 = vmatpush.msra.mxu0 %v191
    %585 = vmatpush.msra.mxu0 %v189
    %586 = vmatpush.msra.mxu0 %v187
    %587 = vmatpush.msra.mxu0 %v185
    %588 = vmatpush.msra.mxu0 %v183
    %589 = vmatpush.msra.mxu0 %v181
    %590 = vmatpush.msra.mxu0 %v179
    %591 = vmatpush.msra.mxu0 %v177
    %592 = vmatpush.msra.mxu0 %v175
    %593 = vmatpush.msra.mxu0 %v173
    %594 = vmatpush.msra.mxu0 %v171
    %595 = vmatpush.msra.mxu0 %v169
    %596 = vmatpush.msra.mxu0 %v167
    %597 = vmatmul.f32.gmra.mxu0 %v362
    %v598 = vpop.f32.mrf.mxu0
    %v599 = vadd.f32 %v579, %v598
    %600 = vdwg.mxu0
    %601 = vmatpush.msra.mxu0 %v229
    %602 = vmatpush.msra.mxu0 %v227
    %603 = vmatpush.msra.mxu0 %v225
    %604 = vmatpush.msra.mxu0 %v223
    %605 = vmatpush.msra.mxu0 %v221
    %606 = vmatpush.msra.mxu0 %v219
    %607 = vmatpush.msra.mxu0 %v217
    %608 = vmatpush.msra.mxu0 %v215
    %609 = vmatpush.msra.mxu0 %v213
    %610 = vmatpush.msra.mxu0 %v211
    %611 = vmatpush.msra.mxu0 %v209
    %612 = vmatpush.msra.mxu0 %v207
    %613 = vmatpush.msra.mxu0 %v205
    %614 = vmatpush.msra.mxu0 %v203
    %615 = vmatpush.msra.mxu0 %v201
    %616 = vmatpush.msra.mxu0 %v199
    %617 = vmatmul.f32.gmra.mxu0 %v363
    %v618 = vpop.f32.mrf.mxu0
    %v619 = vadd.f32 %v599, %v618
    %620 = vdwg.mxu0
    %621 = vmatpush.msra.mxu0 %v261
    %622 = vmatpush.msra.mxu0 %v259
    %623 = vmatpush.msra.mxu0 %v257
    %624 = vmatpush.msra.mxu0 %v255
    %625 = vmatpush.msra.mxu0 %v253
    %626 = vmatpush.msra.mxu0 %v251
    %627 = vmatpush.msra.mxu0 %v249
    %628 = vmatpush.msra.mxu0 %v247
    %629 = vmatpush.msra.mxu0 %v245
    %630 = vmatpush.msra.mxu0 %v243
    %631 = vmatpush.msra.mxu0 %v241
    %632 = vmatpush.msra.mxu0 %v239
    %633 = vmatpush.msra.mxu0 %v237
    %634 = vmatpush.msra.mxu0 %v235
    %635 = vmatpush.msra.mxu0 %v233
    %636 = vmatpush.msra.mxu0 %v231
    %637 = vmatmul.f32.gmra.mxu0 %v364
    %v638 = vpop.f32.mrf.mxu0
    %v639 = vadd.f32 %v619, %v638
    %640 = vdwg.mxu0
    %641 = vmatpush.msra.mxu0 %v293
    %642 = vmatpush.msra.mxu0 %v291
    %643 = vmatpush.msra.mxu0 %v289
    %644 = vmatpush.msra.mxu0 %v287
    %645 = vmatpush.msra.mxu0 %v285
    %646 = vmatpush.msra.mxu0 %v283
    %647 = vmatpush.msra.mxu0 %v281
    %648 = vmatpush.msra.mxu0 %v279
    %649 = vmatpush.msra.mxu0 %v277
    %650 = vmatpush.msra.mxu0 %v275
    %651 = vmatpush.msra.mxu0 %v273
    %652 = vmatpush.msra.mxu0 %v271
    %653 = vmatpush.msra.mxu0 %v269
    %654 = vmatpush.msra.mxu0 %v267
    %655 = vmatpush.msra.mxu0 %v265
    %656 = vmatpush.msra.mxu0 %v263
    %657 = vmatmul.f32.gmra.mxu0 %v365
    %v658 = vpop.f32.mrf.mxu0
    %v659 = vadd.f32 %v639, %v658
    %660 = vdwg.mxu0
    %661 = vmatpush.msra.mxu0 %v325
    %662 = vmatpush.msra.mxu0 %v323
    %663 = vmatpush.msra.mxu0 %v321
    %664 = vmatpush.msra.mxu0 %v319
    %665 = vmatpush.msra.mxu0 %v317
    %666 = vmatpush.msra.mxu0 %v315
    %667 = vmatpush.msra.mxu0 %v313
    %668 = vmatpush.msra.mxu0 %v311
    %669 = vmatpush.msra.mxu0 %v309
    %670 = vmatpush.msra.mxu0 %v307
    %671 = vmatpush.msra.mxu0 %v305
    %672 = vmatpush.msra.mxu0 %v303
    %673 = vmatpush.msra.mxu0 %v301
    %674 = vmatpush.msra.mxu0 %v299
    %675 = vmatpush.msra.mxu0 %v297
    %676 = vmatpush.msra.mxu0 %v295
    %677 = vmatmul.f32.gmra.mxu0 %v366
    %v678 = vpop.f32.mrf.mxu0
    %v679 = vadd.f32 %v659, %v678
    %680 = vdwg.mxu0
    %681 = vmatpush.msra.mxu0 %v357
    %682 = vmatpush.msra.mxu0 %v355
    %683 = vmatpush.msra.mxu0 %v353
    %684 = vmatpush.msra.mxu0 %v351
    %685 = vmatpush.msra.mxu0 %v349
    %686 = vmatpush.msra.mxu0 %v347
    %687 = vmatpush.msra.mxu0 %v345
    %688 = vmatpush.msra.mxu0 %v343
    %689 = vmatpush.msra.mxu0 %v341
    %690 = vmatpush.msra.mxu0 %v339
    %691 = vmatpush.msra.mxu0 %v337
    %692 = vmatpush.msra.mxu0 %v335
    %693 = vmatpush.msra.mxu0 %v333
    %694 = vmatpush.msra.mxu0 %v331
    %695 = vmatpush.msra.mxu0 %v329
    %696 = vmatpush.msra.mxu0 %v327
    %697 = vmatmul.f32.gmra.mxu0 %v367
    %v698 = vpop.f32.mrf.mxu0
    %v699 = vadd.f32 %v679, %v698
    %700 = vdwg.mxu0
    %v701 = vmax.f32 %v539, 0.0
    %v702 = vmax.f32 %v699, 0.0
    %v703 = vld [vmem:[#allocation8] sm:$0xff]
    %v704 = vld [vmem:[#allocation8 + $0x8] sm:$0xff]
    %v705 = vld [vmem:[#allocation8 + $0x10] sm:$0xff]
    %v706 = vld [vmem:[#allocation8 + $0x18] sm:$0xff]
    %v707 = vld [vmem:[#allocation8 + $0x20] sm:$0xff]
    %v708 = vld [vmem:[#allocation8 + $0x28] sm:$0xff]
    %v709 = vld [vmem:[#allocation8 + $0x30] sm:$0xff]
    %v710 = vld [vmem:[#allocation8 + $0x38] sm:$0xff]
    %v711 = vld [vmem:[#allocation8 + $0x40] sm:$0xff]
    %v712 = vld [vmem:[#allocation8 + $0x48] sm:$0xff]
    %v713 = vld [vmem:[#allocation8 + $0x50] sm:$0xff]
    %v714 = vld [vmem:[#allocation8 + $0x58] sm:$0xff]
    %v715 = vld [vmem:[#allocation8 + $0x60] sm:$0xff]
    %v716 = vld [vmem:[#allocation8 + $0x68] sm:$0xff]
    %v717 = vld [vmem:[#allocation8 + $0x70] sm:$0xff]
    %v718 = vld [vmem:[#allocation8 + $0x78] sm:$0xff]
    %v719 = vld [vmem:[#allocation8 + $0x80] sm:$0xff]
    %v720 = vld [vmem:[#allocation8 + $0x88] sm:$0xff]
    %v721 = vld [vmem:[#allocation8 + $0x90] sm:$0xff]
    %v722 = vld [vmem:[#allocation8 + $0x98] sm:$0xff]
    %v723 = vld [vmem:[#allocation8 + $0xa0] sm:$0xff]
    %v724 = vld [vmem:[#allocation8 + $0xa8] sm:$0xff]
    %v725 = vld [vmem:[#allocation8 + $0xb0] sm:$0xff]
    %v726 = vld [vmem:[#allocation8 + $0xb8] sm:$0xff]
    %v727 = vld [vmem:[#allocation8 + $0xc0] sm:$0xff]
    %v728 = vld [vmem:[#allocation8 + $0xc8] sm:$0xff]
    %v729 = vld [vmem:[#allocation8 + $0xd0] sm:$0xff]
    %v730 = vld [vmem:[#allocation8 + $0xd8] sm:$0xff]
    %v731 = vld [vmem:[#allocation8 + $0xe0] sm:$0xff]
    %v732 = vld [vmem:[#allocation8 + $0xe8] sm:$0xff]
    %v733 = vld [vmem:[#allocation8 + $0xf0] sm:$0xff]
    %v734 = vld [vmem:[#allocation8 + $0xf8] sm:$0xff]
    %v735 = vld [vmem:[#allocation8 + $0x100] sm:$0xff]
    %v736 = vld [vmem:[#allocation8 + $0x108] sm:$0xff]
    %v737 = vld [vmem:[#allocation8 + $0x110] sm:$0xff]
    %v738 = vld [vmem:[#allocation8 + $0x118] sm:$0xff]
    %v739 = vld [vmem:[#allocation8 + $0x120] sm:$0xff]
    %v740 = vld [vmem:[#allocation8 + $0x128] sm:$0xff]
    %v741 = vld [vmem:[#allocation8 + $0x130] sm:$0xff]
    %v742 = vld [vmem:[#allocation8 + $0x138] sm:$0xff]
    %v743 = vld [vmem:[#allocation8 + $0x140] sm:$0xff]
    %v744 = vld [vmem:[#allocation8 + $0x148] sm:$0xff]
    %v745 = vld [vmem:[#allocation8 + $0x150] sm:$0xff]
    %v746 = vld [vmem:[#allocation8 + $0x158] sm:$0xff]
    %v747 = vld [vmem:[#allocation8 + $0x160] sm:$0xff]
    %v748 = vld [vmem:[#allocation8 + $0x168] sm:$0xff]
    %v749 = vld [vmem:[#allocation8 + $0x170] sm:$0xff]
    %v750 = vld [vmem:[#allocation8 + $0x178] sm:$0xff]
    %v751 = vld [vmem:[#allocation8 + $0x180] sm:$0xff]
    %v752 = vld [vmem:[#allocation8 + $0x188] sm:$0xff]
    %v753 = vld [vmem:[#allocation8 + $0x190] sm:$0xff]
    %v754 = vld [vmem:[#allocation8 + $0x198] sm:$0xff]
    %v755 = vld [vmem:[#allocation8 + $0x1a0] sm:$0xff]
    %v756 = vld [vmem:[#allocation8 + $0x1a8] sm:$0xff]
    %v757 = vld [vmem:[#allocation8 + $0x1b0] sm:$0xff]
    %v758 = vld [vmem:[#allocation8 + $0x1b8] sm:$0xff]
    %v759 = vld [vmem:[#allocation8 + $0x1c0] sm:$0xff]
    %v760 = vld [vmem:[#allocation8 + $0x1c8] sm:$0xff]
    %v761 = vld [vmem:[#allocation8 + $0x1d0] sm:$0xff]
    %v762 = vld [vmem:[#allocation8 + $0x1d8] sm:$0xff]
    %v763 = vld [vmem:[#allocation8 + $0x1e0] sm:$0xff]
    %v764 = vld [vmem:[#allocation8 + $0x1e8] sm:$0xff]
    %v765 = vld [vmem:[#allocation8 + $0x1f0] sm:$0xff]
    %v766 = vld [vmem:[#allocation8 + $0x1f8] sm:$0xff]
    %v767 = vld [vmem:[%s4] sm:$0x3]
    %v769 = vperm.slane %v767, 0
    %v770 = vperm.slane %v767, 1
    %773 = vmatpush.msra.mxu0 %v733
    %774 = vmatpush.msra.mxu0 %v731
    %775 = vmatpush.msra.mxu0 %v729
    %776 = vmatpush.msra.mxu0 %v727
    %777 = vmatpush.msra.mxu0 %v725
    %778 = vmatpush.msra.mxu0 %v723
    %779 = vmatpush.msra.mxu0 %v721
    %780 = vmatpush.msra.mxu0 %v719
    %781 = vmatpush.msra.mxu0 %v717
    %782 = vmatpush.msra.mxu0 %v715
    %783 = vmatpush.msra.mxu0 %v713
    %784 = vmatpush.msra.mxu0 %v711
    %785 = vmatpush.msra.mxu0 %v709
    %786 = vmatpush.msra.mxu0 %v707
    %787 = vmatpush.msra.mxu0 %v705
    %788 = vmatpush.msra.mxu0 %v703
    %789 = vmatmul.f32.gmra.mxu0 %v701
    %v790 = vpop.f32.mrf.mxu0
    %v791 = vadd.f32 %v769, %v790
    %792 = vdwg.mxu0
    %793 = vmatpush.msra.mxu0 %v765
    %794 = vmatpush.msra.mxu0 %v763
    %795 = vmatpush.msra.mxu0 %v761
    %796 = vmatpush.msra.mxu0 %v759
    %797 = vmatpush.msra.mxu0 %v757
    %798 = vmatpush.msra.mxu0 %v755
    %799 = vmatpush.msra.mxu0 %v753
    %800 = vmatpush.msra.mxu0 %v751
    %801 = vmatpush.msra.mxu0 %v749
    %802 = vmatpush.msra.mxu0 %v747
    %803 = vmatpush.msra.mxu0 %v745
    %804 = vmatpush.msra.mxu0 %v743
    %805 = vmatpush.msra.mxu0 %v741
    %806 = vmatpush.msra.mxu0 %v739
    %807 = vmatpush.msra.mxu0 %v737
    %808 = vmatpush.msra.mxu0 %v735
    %809 = vmatmul.f32.gmra.mxu0 %v702
    %v810 = vpop.f32.mrf.mxu0
    %v811 = vadd.f32 %v791, %v810
    %812 = vdwg.mxu0
    %813 = vmatpush.msra.mxu0 %v734
    %814 = vmatpush.msra.mxu0 %v732
    %815 = vmatpush.msra.mxu0 %v730
    %816 = vmatpush.msra.mxu0 %v728
    %817 = vmatpush.msra.mxu0 %v726
    %818 = vmatpush.msra.mxu0 %v724
    %819 = vmatpush.msra.mxu0 %v722
    %820 = vmatpush.msra.mxu0 %v720
    %821 = vmatpush.msra.mxu0 %v718
    %822 = vmatpush.msra.mxu0 %v716
    %823 = vmatpush.msra.mxu0 %v714
    %824 = vmatpush.msra.mxu0 %v712
    %825 = vmatpush.msra.mxu0 %v710
    %826 = vmatpush.msra.mxu0 %v708
    %827 = vmatpush.msra.mxu0 %v706
    %828 = vmatpush.msra.mxu0 %v704
    %829 = vmatmul.f32.gmra.mxu0 %v701
    %v830 = vpop.f32.mrf.mxu0
    %v831 = vadd.f32 %v770, %v830
    %832 = vdwg.mxu0
    %833 = vmatpush.msra.mxu0 %v766
    %834 = vmatpush.msra.mxu0 %v764
    %835 = vmatpush.msra.mxu0 %v762
    %836 = vmatpush.msra.mxu0 %v760
    %837 = vmatpush.msra.mxu0 %v758
    %838 = vmatpush.msra.mxu0 %v756
    %839 = vmatpush.msra.mxu0 %v754
    %840 = vmatpush.msra.mxu0 %v752
    %841 = vmatpush.msra.mxu0 %v750
    %842 = vmatpush.msra.mxu0 %v748
    %843 = vmatpush.msra.mxu0 %v746
    %844 = vmatpush.msra.mxu0 %v744
    %845 = vmatpush.msra.mxu0 %v742
    %846 = vmatpush.msra.mxu0 %v740
    %847 = vmatpush.msra.mxu0 %v738
    %848 = vmatpush.msra.mxu0 %v736
    %849 = vmatmul.f32.gmra.mxu0 %v702
    %v850 = vpop.f32.mrf.mxu0
    %v851 = vadd.f32 %v831, %v850
    %852 = vdwg.mxu0
    %v853 = vmax.f32 %v811, 0.0
    %v854 = vmax.f32 %v851, 0.0
    %v855 = vld [vmem:[#allocation10] sm:$0xff]
    %v856 = vld [vmem:[#allocation10 + $0x8] sm:$0xff]
    %v857 = vld [vmem:[#allocation10 + $0x10] sm:$0xff]
    %v858 = vld [vmem:[#allocation10 + $0x18] sm:$0xff]
    %v859 = vld [vmem:[#allocation10 + $0x20] sm:$0xff]
    %v860 = vld [vmem:[#allocation10 + $0x28] sm:$0xff]
    %v861 = vld [vmem:[#allocation10 + $0x30] sm:$0xff]
    %v862 = vld [vmem:[#allocation10 + $0x38] sm:$0xff]
    %v863 = vld [vmem:[#allocation10 + $0x40] sm:$0xff]
    %v864 = vld [vmem:[#allocation10 + $0x48] sm:$0xff]
    %v865 = vld [vmem:[#allocation10 + $0x50] sm:$0xff]
    %v866 = vld [vmem:[#allocation10 + $0x58] sm:$0xff]
    %v867 = vld [vmem:[#allocation10 + $0x60] sm:$0xff]
    %v868 = vld [vmem:[#allocation10 + $0x68] sm:$0xff]
    %v869 = vld [vmem:[#allocation10 + $0x70] sm:$0xff]
    %v870 = vld [vmem:[#allocation10 + $0x78] sm:$0xff]
    %v871 = vld [vmem:[#allocation10 + $0x80] sm:$0xff]
    %v872 = vld [vmem:[#allocation10 + $0x88] sm:$0xff]
    %v873 = vld [vmem:[#allocation10 + $0x90] sm:$0xff]
    %v874 = vld [vmem:[#allocation10 + $0x98] sm:$0xff]
    %v875 = vld [vmem:[#allocation10 + $0xa0] sm:$0xff]
    %v876 = vld [vmem:[#allocation10 + $0xa8] sm:$0xff]
    %v877 = vld [vmem:[#allocation10 + $0xb0] sm:$0xff]
    %v878 = vld [vmem:[#allocation10 + $0xb8] sm:$0xff]
    %v879 = vld [vmem:[#allocation10 + $0xc0] sm:$0xff]
    %v880 = vld [vmem:[#allocation10 + $0xc8] sm:$0xff]
    %v881 = vld [vmem:[#allocation10 + $0xd0] sm:$0xff]
    %v882 = vld [vmem:[#allocation10 + $0xd8] sm:$0xff]
    %v883 = vld [vmem:[#allocation10 + $0xe0] sm:$0xff]
    %v884 = vld [vmem:[#allocation10 + $0xe8] sm:$0xff]
    %v885 = vld [vmem:[#allocation10 + $0xf0] sm:$0xff]
    %v886 = vld [vmem:[#allocation10 + $0xf8] sm:$0xff]
    %v887 = vld [vmem:[%s6] sm:$0x1]
    %888 = vmatpush.msra.mxu0 %v870
    %889 = vmatpush.msra.mxu0 %v869
    %890 = vmatpush.msra.mxu0 %v868
    %891 = vmatpush.msra.mxu0 %v867
    %892 = vmatpush.msra.mxu0 %v866
    %893 = vmatpush.msra.mxu0 %v865
    %894 = vmatpush.msra.mxu0 %v864
    %895 = vmatpush.msra.mxu0 %v863
    %896 = vmatpush.msra.mxu0 %v862
    %897 = vmatpush.msra.mxu0 %v861
    %898 = vmatpush.msra.mxu0 %v860
    %899 = vmatpush.msra.mxu0 %v859
    %900 = vmatpush.msra.mxu0 %v858
    %901 = vmatpush.msra.mxu0 %v857
    %902 = vmatpush.msra.mxu0 %v856
    %903 = vmatpush.msra.mxu0 %v855
    %904 = vmatmul.f32.gmra.mxu0 %v853
    %v905 = vpop.f32.mrf.mxu0
    %v906 = vadd.f32 %v887, %v905
    %907 = vdwg.mxu0
    %908 = vmatpush.msra.mxu0 %v886
    %909 = vmatpush.msra.mxu0 %v885
    %910 = vmatpush.msra.mxu0 %v884
    %911 = vmatpush.msra.mxu0 %v883
    %912 = vmatpush.msra.mxu0 %v882
    %913 = vmatpush.msra.mxu0 %v881
    %914 = vmatpush.msra.mxu0 %v880
    %915 = vmatpush.msra.mxu0 %v879
    %916 = vmatpush.msra.mxu0 %v878
    %917 = vmatpush.msra.mxu0 %v877
    %918 = vmatpush.msra.mxu0 %v876
    %919 = vmatpush.msra.mxu0 %v875
    %920 = vmatpush.msra.mxu0 %v874
    %921 = vmatpush.msra.mxu0 %v873
    %922 = vmatpush.msra.mxu0 %v872
    %923 = vmatpush.msra.mxu0 %v871
    %924 = vmatmul.f32.gmra.mxu0 %v854
    %v925 = vpop.f32.mrf.mxu0
    %v926 = vadd.f32 %v906, %v925
    %927 = vdwg.mxu0
    %v928 = vsub.f32 0.0, %v926
    %v929 = vmul.f32 %v928, 1.442695
    %v930 = vpow.pop %v929
    %v931 = vadd.f32 %v930, 1.0
    %v932 = vrcp.pop %v931
    %933 = vst [vmem:[#allocation11] sm:$0x1] %v932
    // Predicated region
    $region50: #{tpu_custom_call.1} parent=1 // pred_check
      _
    $region51: #{tpu_custom_call.1} parent=1 // pred_check_branch
      %935 = sbr.rel (0) target = $region53
    $region52: #{tpu_custom_call.1} parent=1 // pred_region
      %937 = vsyncadd [#allocation4], 0
      %s939 = sshll.u32 [#allocation11], 4
      %s940 = int_to_ptr.vmem [resolvable:$true] %s939
      %s941 = sshll.u32 %s7, 4
      %s942 = int_to_ptr.hbm [resolvable:$true] %s941
      %944 = dma.vmem_to_hbm [thread:$0]  %s940, 16, %s942, [#allocation4]
    $region53: #{tpu_custom_call.1} parent=1 // pred_fallthru
      _
    // Predicated region
    $region54: #{tpu_custom_call.1} parent=1 // pred_check
      _
    $region55: #{tpu_custom_call.1} parent=1 // pred_check_branch
      %946 = sbr.rel (0) target = $region57
    $region56: #{tpu_custom_call.1} parent=1 // pred_region
      %948 = dma.done [#allocation4], 16
    $region57: #{tpu_custom_call.1} parent=1 // pred_fallthru
      _
    %949 = vsyncpa [#allocation3], 1
    %950 = vsyncpa [#allocation6], 1
    %951 = vsyncpa [#allocation9], 1
    %952 = vsyncpa [#allocation4], 1

</llo_original>
